<compile_context>
chip_gen: v5e
topology: v5e:2x2
jax: 0.10.0
libtpu: 0.0.40
codegen_flags: <defaults>
</compile_context>

<pallas_src>
import functools

import jax
import jax.numpy as jnp
from jax import lax
from jax.experimental import pallas as pl
from jax.experimental.pallas import tpu as pltpu

# cfg (small shapes consistent with the module)
CHANNEL, HEIGHT, WIDTH = 4, 16, 16
HW = HEIGHT * WIDTH
CHW = CHANNEL * HW
HIDDEN = 20
THETA_DIM = 6
MAX_BATCH_TILE = 32  # upper bound on images processed per grid step


def _pick_batch_tile(B, max_tile=MAX_BATCH_TILE):
    """Images per grid step.

    Prefers (a) an exact divisor of B, so no input/output padding (and no padded
    full-image HBM copy) is ever needed, (b) >= 2 grid steps so the "parallel"
    grid axis shards across both v7x TensorCores, and (c) the largest such tile
    (capped at max_tile) to amortize the ~0.35us per-step overhead on v5e/v6e.
    """
    cap = min(max_tile, max(1, B // 2))
    bt = 1
    for d in range(cap, 0, -1):          # largest divisor of B <= cap
        if B % d == 0:
            bt = d
            break
    # Awkward (near-prime) batch sizes: one full-batch step beats many tiny steps.
    if bt < min(4, cap) and B <= max_tile:
        bt = B
    return bt


def _grid_sample_kernel(img_ref, x0_ref, y0_ref, fx_ref, fy_ref, out_ref, *, bt, c, h, w):
    """Bilinear grid_sample (zeros padding) for `bt` images of one grid step.

    img_ref : (bt, c*h, w)   f32   image rows (c, h) stacked on sublanes
    x0_ref  : (bt, 1, h*w)   i32   floor of unnormalized x sample coordinate
    y0_ref  : (bt, 1, h*w)   i32   floor of unnormalized y sample coordinate
    fx_ref  : (bt, 1, h*w)   f32   fractional weight of corner x0+1
    fy_ref  : (bt, 1, h*w)   f32   fractional weight of corner y0+1
    out_ref : (bt, c, h*w)   f32   resampled images
    """
    hw = h * w
    # Column / row index planes; hoisted out of the per-image loop.
    wi = lax.broadcasted_iota(jnp.int32, (w, hw), 0)       # (W, HW)
    hi = lax.broadcasted_iota(jnp.int32, (h, hw), 0)       # (H, HW)
    wi_m1 = wi - 1                                         # (wi_m1 == x0) <=> (wi == x0 + 1)
    hi_m1 = hi - 1

    for i in range(bt):  # small static trip count -> fully unrolled at trace time
        x0 = x0_ref[i]                                     # (1, HW) i32
        y0 = y0_ref[i]
        fx = fx_ref[i]                                     # (1, HW) f32
        fy = fy_ref[i]

        # Separable one-hot interpolation matrices (single select chain).
        # OOB corners (x0 < 0, x0+1 >= W, ...) match no index row -> contribute 0,
        # exactly grid_sample's padding_mode='zeros'.
        xoh = jnp.where(wi == x0, 1.0 - fx, jnp.where(wi_m1 == x0, fx, 0.0))   # (W, HW)
        yoh = jnp.where(hi == y0, 1.0 - fy, jnp.where(hi_m1 == y0, fy, 0.0))   # (H, HW)

        # Gather along x on the MXU, then combine along y via sublane-aligned
        # static per-channel slices + sublane reduce (no reshape / relayout).
        t = jnp.dot(img_ref[i], xoh, preferred_element_type=jnp.float32)       # (C*H, HW)
        res = jnp.concatenate(
            [jnp.sum(t[ch * h:(ch + 1) * h, :] * yoh, axis=0, keepdims=True)
             for ch in range(c)],
            axis=0)                                                            # (C, HW)

        # Stream the result out immediately (lane-dense (C, HW) store); keeps
        # live vregs low so bt can be raised without spilling.
        out_ref[i] = res.astype(out_ref.dtype)


def _grid_sample_pallas(img, x0i, y0i, fx, fy):
    """img: (B, C, H, W) f32; x0i/y0i: (B, HW) i32; fx/fy: (B, HW) f32."""
    B, C, H, W = img.shape
    hw = H * W

    bt = _pick_batch_tile(B)
    n_steps = B // bt                      # bt always divides B -> never pad anything

    img_chw = img.reshape(B, C * H, W)     # free view of the NCHW bytes
    x0i = x0i.reshape(B, 1, hw)
    y0i = y0i.reshape(B, 1, hw)
    fx = fx.reshape(B, 1, hw)
    fy = fy.reshape(B, 1, hw)

    kernel = functools.partial(_grid_sample_kernel, bt=bt, c=C, h=H, w=W)
    coord_spec = pl.BlockSpec((bt, 1, hw), lambda b: (b, 0, 0))

    out = pl.pallas_call(
        kernel,
        out_shape=jax.ShapeDtypeStruct((B, C, hw), jnp.float32),
        grid_spec=pltpu.PrefetchScalarGridSpec(
            num_scalar_prefetch=0,
            grid=(n_steps,),
            in_specs=[
                pl.BlockSpec((bt, C * H, W), lambda b: (b, 0, 0)),  # images
                coord_spec,                                         # x0 (int)
                coord_spec,                                         # y0 (int)
                coord_spec,                                         # fx
                coord_spec,                                         # fy
            ],
            out_specs=pl.BlockSpec((bt, C, hw), lambda b: (b, 0, 0)),
        ),
        compiler_params=pltpu.CompilerParams(dimension_semantics=("parallel",)),
    )(img_chw, x0i, y0i, fx, fy)

    return out.reshape(B, C, H, W)


@jax.jit
def local_network_forward(img, w1, b1, w2, b2):
    """Forward pass of LocalNetwork (inference). img: (B, C, H, W) -> (B, C, H, W)."""
    B, C, H, W = img.shape
    img = img.astype(jnp.float32)

    # ---- localization FC (batched XLA): Linear -> Tanh -> Dropout -> Linear -> Tanh
    # TODO(synk): nn.Dropout is identity at inference; training-mode dropout not implemented.
    xf = img.reshape(B, C * H * W)
    h1 = jnp.tanh(xf @ w1 + b1)                                    # (B, 20)
    theta = jnp.tanh(h1 @ w2 + b2)                                 # (B, 6)

    # ---- F.affine_grid (align_corners=False): [gx; gy] = theta.view(2,3) @ [x; y; 1]
    xs = (2.0 * jnp.arange(W, dtype=jnp.float32) + 1.0) / W - 1.0
    ys = (2.0 * jnp.arange(H, dtype=jnp.float32) + 1.0) / H - 1.0
    gyy, gxx = jnp.meshgrid(ys, xs, indexing="ij")
    base = jnp.stack([gxx.ravel(), gyy.ravel(), jnp.ones(H * W, jnp.float32)], axis=0)  # (3, HW)
    gx = theta[:, 0:3] @ base                                      # (B, HW)
    gy = theta[:, 3:6] @ base

    # ---- unnormalize to pixel coords (align_corners=False); split corner + frac
    ix = (gx + 1.0) * (W * 0.5) - 0.5
    iy = (gy + 1.0) * (H * 0.5) - 0.5
    x0f = jnp.floor(ix)
    y0f = jnp.floor(iy)
    fx = ix - x0f                                                  # weight of x0+1
    fy = iy - y0f                                                  # weight of y0+1
    x0i = x0f.astype(jnp.int32)
    y0i = y0f.astype(jnp.int32)

    # ---- F.grid_sample (bilinear, zeros padding) in Pallas
    return _grid_sample_pallas(img, x0i, y0i, fx, fy)


def init_params(key):
    # fc1: PyTorch-default-ish init (uniform(-1/sqrt(fan_in), 1/sqrt(fan_in))), deterministic.
    k1, k2 = jax.random.split(key)
    bound = 1.0 / (CHW ** 0.5)
    w1 = jax.random.uniform(k1, (CHW, HIDDEN), jnp.float32, -bound, bound)  # stored (in, out)
    b1 = jax.random.uniform(k2, (1, HIDDEN), jnp.float32, -bound, bound)
    # fc2: weight = 0, bias = [1, 0, 0, 0, 1, 0], as in the module's __init__.
    w2 = jnp.zeros((HIDDEN, THETA_DIM), jnp.float32)
    b2 = jnp.array([[1.0, 0.0, 0.0, 0.0, 1.0, 0.0]], jnp.float32)
    return w1, b1, w2, b2


def reference(img, w1, b1, w2, b2):
    """Pure-JAX reference (gather-based grid_sample) for correctness checking."""
    B, C, H, W = img.shape
    xf = img.reshape(B, -1)
    h = jnp.tanh(xf @ w1 + b1)
    theta = jnp.tanh(h @ w2 + b2)                                             # (B, 6)
    xs = (2.0 * jnp.arange(W, dtype=jnp.float32) + 1.0) / W - 1.0
    ys = (2.0 * jnp.arange(H, dtype=jnp.float32) + 1.0) / H - 1.0
    gyy, gxx = jnp.meshgrid(ys, xs, indexing="ij")
    base = jnp.stack([gxx.ravel(), gyy.ravel(), jnp.ones(H * W, jnp.float32)], axis=0)
    gx = theta[:, 0:3] @ base                                                 # (B, HW)
    gy = theta[:, 3:6] @ base
    ix = (gx + 1.0) * W / 2.0 - 0.5
    iy = (gy + 1.0) * H / 2.0 - 0.5
    x0 = jnp.floor(ix); x1 = x0 + 1.0
    y0 = jnp.floor(iy); y1 = y0 + 1.0
    wx1 = ix - x0; wx0 = 1.0 - wx1
    wy1 = iy - y0; wy0 = 1.0 - wy1
    imgf = img.reshape(B, C, H * W)

    def corner(xc, yc, wc):
        valid = (xc >= 0) & (xc <= W - 1) & (yc >= 0) & (yc <= H - 1)
        xi = jnp.clip(xc, 0, W - 1).astype(jnp.int32)
        yi = jnp.clip(yc, 0, H - 1).astype(jnp.int32)
        idx = yi * W + xi                                                     # (B, HW)
        vals = jnp.take_along_axis(imgf, idx[:, None, :], axis=2)             # (B, C, HW)
        return vals * jnp.where(valid, wc, 0.0)[:, None, :]

    out = (corner(x0, y0, wx0 * wy0) + corner(x1, y0, wx1 * wy0)
           + corner(x0, y1, wx0 * wy1) + corner(x1, y1, wx1 * wy1))
    return out.reshape(B, C, H, W)


if __name__ == "__main__":
    key = jax.random.PRNGKey(0)
    k_img, k_par = jax.random.split(key)
    img = jax.random.normal(k_img, (2, CHANNEL, HEIGHT, WIDTH), jnp.float32)
    w1, b1, w2, b2 = init_params(k_par)

    # Module-faithful init (identity-ish theta, all samples in range).
    out = jax.block_until_ready(local_network_forward(img, w1, b1, w2, b2))
    ref = reference(img, w1, b1, w2, b2)
    assert out.shape == img.shape
    assert jnp.allclose(out, ref, atol=1e-3, rtol=1e-3), "mismatch vs pure-JAX reference"

    # Second check with non-trivial theta (exercises out-of-range zero padding).
    k1, k2 = jax.random.split(k_par)
    w2b = 0.5 * jax.random.normal(k1, (HIDDEN, THETA_DIM), jnp.float32)
    b2b = 0.5 * jax.random.normal(k2, (1, THETA_DIM), jnp.float32)
    out2 = jax.block_until_ready(local_network_forward(img, w1, b1, w2b, b2b))
    ref2 = reference(img, w1, b1, w2b, b2b)
    assert jnp.allclose(out2, ref2, atol=1e-3, rtol=1e-3), "mismatch (random theta)"

    print("KERNEL_OK")
</pallas_src>

<mosaic_0001>
module attributes {stable_mosaic.version = 11 : i64} {
  func.func @_grid_sample_kernel(%arg0: i32, %arg1: memref<1x64x16xf32, #tpu.memory_space<vmem>>, %arg2: memref<1x1x256xi32, #tpu.memory_space<vmem>>, %arg3: memref<1x1x256xi32, #tpu.memory_space<vmem>>, %arg4: memref<1x1x256xf32, #tpu.memory_space<vmem>>, %arg5: memref<1x1x256xf32, #tpu.memory_space<vmem>>, %arg6: memref<1x4x256xf32, #tpu.memory_space<vmem>>) attributes {dimension_semantics = [#tpu.dimension_semantics<parallel>], iteration_bounds = array<i64: 2>, scalar_prefetch = 0 : i64, scratch_operands = 0 : i64, tpu.core_type = #tpu.core_type<tc>, window_params = [{transform_indices = @transform_0, window_bounds = array<i64: 1, 64, 16>}, {transform_indices = @transform_1, window_bounds = array<i64: 1, 1, 256>}, {transform_indices = @transform_2, window_bounds = array<i64: 1, 1, 256>}, {transform_indices = @transform_3, window_bounds = array<i64: 1, 1, 256>}, {transform_indices = @transform_4, window_bounds = array<i64: 1, 1, 256>}, {transform_indices = @transform_5, window_bounds = array<i64: 1, 4, 256>}]} {
    %0 = tpu.iota {dimensions = array<i32: 0>} : vector<16x256xi32>
    %1 = tpu.iota {dimensions = array<i32: 0>} : vector<16x256xi32>
    %c1_i32 = arith.constant 1 : i32
    %2 = vector.broadcast %c1_i32 : i32 to vector<16x256xi32>
    %3 = arith.subi %0, %2 : vector<16x256xi32>
    %c1_i32_0 = arith.constant 1 : i32
    %4 = vector.broadcast %c1_i32_0 : i32 to vector<16x256xi32>
    %5 = arith.subi %1, %4 : vector<16x256xi32>
    %c0 = arith.constant 0 : index
    %c0_1 = arith.constant 0 : index
    %c0_2 = arith.constant 0 : index
    %6 = vector.load %arg2[%c0, %c0_1, %c0_2] : memref<1x1x256xi32, #tpu.memory_space<vmem>>, vector<1x1x256xi32>
    %7 = vector.shape_cast %6 : vector<1x1x256xi32> to vector<1x256xi32>
    %c0_3 = arith.constant 0 : index
    %c0_4 = arith.constant 0 : index
    %c0_5 = arith.constant 0 : index
    %8 = vector.load %arg3[%c0_3, %c0_4, %c0_5] : memref<1x1x256xi32, #tpu.memory_space<vmem>>, vector<1x1x256xi32>
    %9 = vector.shape_cast %8 : vector<1x1x256xi32> to vector<1x256xi32>
    %c0_6 = arith.constant 0 : index
    %c0_7 = arith.constant 0 : index
    %c0_8 = arith.constant 0 : index
    %10 = vector.load %arg4[%c0_6, %c0_7, %c0_8] : memref<1x1x256xf32, #tpu.memory_space<vmem>>, vector<1x1x256xf32>
    %11 = vector.shape_cast %10 : vector<1x1x256xf32> to vector<1x256xf32>
    %c0_9 = arith.constant 0 : index
    %c0_10 = arith.constant 0 : index
    %c0_11 = arith.constant 0 : index
    %12 = vector.load %arg5[%c0_9, %c0_10, %c0_11] : memref<1x1x256xf32, #tpu.memory_space<vmem>>, vector<1x1x256xf32>
    %13 = vector.shape_cast %12 : vector<1x1x256xf32> to vector<1x256xf32>
    %14 = vector.broadcast %7 : vector<1x256xi32> to vector<16x256xi32>
    %15 = arith.cmpi eq, %0, %14 : vector<16x256xi32>
    %cst = arith.constant 1.000000e+00 : f32
    %16 = vector.broadcast %cst : f32 to vector<1x256xf32>
    %17 = arith.subf %16, %11 : vector<1x256xf32>
    %18 = vector.broadcast %7 : vector<1x256xi32> to vector<16x256xi32>
    %19 = arith.cmpi eq, %3, %18 : vector<16x256xi32>
    %cst_12 = arith.constant 0.000000e+00 : f32
    %20 = vector.shape_cast %11 : vector<1x256xf32> to vector<1x256xf32>
    %21 = vector.broadcast %20 : vector<1x256xf32> to vector<16x256xf32>
    %22 = vector.broadcast %cst_12 : f32 to vector<16x256xf32>
    %23 = arith.select %19, %21, %22 : vector<16x256xi1>, vector<16x256xf32>
    %24 = vector.shape_cast %17 : vector<1x256xf32> to vector<1x256xf32>
    %25 = vector.broadcast %24 : vector<1x256xf32> to vector<16x256xf32>
    %26 = arith.select %15, %25, %23 : vector<16x256xi1>, vector<16x256xf32>
    %27 = vector.broadcast %9 : vector<1x256xi32> to vector<16x256xi32>
    %28 = arith.cmpi eq, %1, %27 : vector<16x256xi32>
    %cst_13 = arith.constant 1.000000e+00 : f32
    %29 = vector.broadcast %cst_13 : f32 to vector<1x256xf32>
    %30 = arith.subf %29, %13 : vector<1x256xf32>
    %31 = vector.broadcast %9 : vector<1x256xi32> to vector<16x256xi32>
    %32 = arith.cmpi eq, %5, %31 : vector<16x256xi32>
    %cst_14 = arith.constant 0.000000e+00 : f32
    %33 = vector.shape_cast %13 : vector<1x256xf32> to vector<1x256xf32>
    %34 = vector.broadcast %33 : vector<1x256xf32> to vector<16x256xf32>
    %35 = vector.broadcast %cst_14 : f32 to vector<16x256xf32>
    %36 = arith.select %32, %34, %35 : vector<16x256xi1>, vector<16x256xf32>
    %37 = vector.shape_cast %30 : vector<1x256xf32> to vector<1x256xf32>
    %38 = vector.broadcast %37 : vector<1x256xf32> to vector<16x256xf32>
    %39 = arith.select %28, %38, %36 : vector<16x256xi1>, vector<16x256xf32>
    %c0_15 = arith.constant 0 : index
    %c0_16 = arith.constant 0 : index
    %c0_17 = arith.constant 0 : index
    %40 = vector.load %arg1[%c0_15, %c0_16, %c0_17] : memref<1x64x16xf32, #tpu.memory_space<vmem>>, vector<1x64x16xf32>
    %41 = vector.shape_cast %40 : vector<1x64x16xf32> to vector<64x16xf32>
    %cst_18 = arith.constant dense<0.000000e+00> : vector<64x256xf32>
    %42 = tpu.matmul %41, %26, %cst_18 {dimension_numbers = #tpu.dot_dimension_numbers<[1], [0], [0], [1], [0, 0, 1, 1], [], []>} : vector<64x16xf32>, vector<16x256xf32>, vector<64x256xf32> -> vector<64x256xf32>
    %43 = vector.extract_strided_slice %42 {offsets = [0, 0], sizes = [16, 256], strides = [1, 1]} : vector<64x256xf32> to vector<16x256xf32>
    %44 = arith.mulf %43, %39 : vector<16x256xf32>
    %cst_19 = arith.constant dense<0.000000e+00> : vector<256xf32>
    %45 = vector.multi_reduction <add>, %44, %cst_19 [0] : vector<16x256xf32> to vector<256xf32>
    %46 = vector.shape_cast %45 : vector<256xf32> to vector<1x256xf32>
    %47 = vector.extract_strided_slice %42 {offsets = [16, 0], sizes = [16, 256], strides = [1, 1]} : vector<64x256xf32> to vector<16x256xf32>
    %48 = arith.mulf %47, %39 : vector<16x256xf32>
    %cst_20 = arith.constant dense<0.000000e+00> : vector<256xf32>
    %49 = vector.multi_reduction <add>, %48, %cst_20 [0] : vector<16x256xf32> to vector<256xf32>
    %50 = vector.shape_cast %49 : vector<256xf32> to vector<1x256xf32>
    %51 = vector.extract_strided_slice %42 {offsets = [32, 0], sizes = [16, 256], strides = [1, 1]} : vector<64x256xf32> to vector<16x256xf32>
    %52 = arith.mulf %51, %39 : vector<16x256xf32>
    %cst_21 = arith.constant dense<0.000000e+00> : vector<256xf32>
    %53 = vector.multi_reduction <add>, %52, %cst_21 [0] : vector<16x256xf32> to vector<256xf32>
    %54 = vector.shape_cast %53 : vector<256xf32> to vector<1x256xf32>
    %55 = vector.extract_strided_slice %42 {offsets = [48, 0], sizes = [16, 256], strides = [1, 1]} : vector<64x256xf32> to vector<16x256xf32>
    %56 = arith.mulf %55, %39 : vector<16x256xf32>
    %cst_22 = arith.constant dense<0.000000e+00> : vector<256xf32>
    %57 = vector.multi_reduction <add>, %56, %cst_22 [0] : vector<16x256xf32> to vector<256xf32>
    %58 = vector.shape_cast %57 : vector<256xf32> to vector<1x256xf32>
    %59 = tpu.concatenate %46, %50, %54, %58 in 0 : vector<1x256xf32>, vector<1x256xf32>, vector<1x256xf32>, vector<1x256xf32> -> vector<4x256xf32>
    %c0_23 = arith.constant 0 : index
    %c0_24 = arith.constant 0 : index
    %c0_25 = arith.constant 0 : index
    %60 = vector.load %arg6[%c0_23, %c0_24, %c0_25] : memref<1x4x256xf32, #tpu.memory_space<vmem>>, vector<1x4x256xf32>
    %61 = vector.shape_cast %60 : vector<1x4x256xf32> to vector<4x256xf32>
    %62 = vector.shape_cast %59 : vector<4x256xf32> to vector<1x4x256xf32>
    tpu.vector_store %arg6[%c0_23, %c0_24, %c0_25], %62 {strides = array<i32>} : memref<1x4x256xf32, #tpu.memory_space<vmem>>, vector<1x4x256xf32>,
    return
  }
  func.func @transform_0(%arg0: i32) -> (i32, i32, i32) {
    %c0_i32 = arith.constant 0 : i32
    %c0_i32_0 = arith.constant 0 : i32
    %c0_i32_1 = arith.constant 0 : i32
    return %arg0, %c0_i32, %c0_i32_0 : i32, i32, i32
  }
  func.func @transform_1(%arg0: i32) -> (i32, i32, i32) {
    %c0_i32 = arith.constant 0 : i32
    %c0_i32_0 = arith.constant 0 : i32
    %c0_i32_1 = arith.constant 0 : i32
    return %arg0, %c0_i32, %c0_i32_0 : i32, i32, i32
  }
  func.func @transform_2(%arg0: i32) -> (i32, i32, i32) {
    %c0_i32 = arith.constant 0 : i32
    %c0_i32_0 = arith.constant 0 : i32
    %c0_i32_1 = arith.constant 0 : i32
    return %arg0, %c0_i32, %c0_i32_0 : i32, i32, i32
  }
  func.func @transform_3(%arg0: i32) -> (i32, i32, i32) {
    %c0_i32 = arith.constant 0 : i32
    %c0_i32_0 = arith.constant 0 : i32
    %c0_i32_1 = arith.constant 0 : i32
    return %arg0, %c0_i32, %c0_i32_0 : i32, i32, i32
  }
  func.func @transform_4(%arg0: i32) -> (i32, i32, i32) {
    %c0_i32 = arith.constant 0 : i32
    %c0_i32_0 = arith.constant 0 : i32
    %c0_i32_1 = arith.constant 0 : i32
    return %arg0, %c0_i32, %c0_i32_0 : i32, i32, i32
  }
  func.func @transform_5(%arg0: i32) -> (i32, i32, i32) {
    %c0_i32 = arith.constant 0 : i32
    %c0_i32_0 = arith.constant 0 : i32
    %c0_i32_1 = arith.constant 0 : i32
    return %arg0, %c0_i32, %c0_i32_0 : i32, i32, i32
  }
}

</mosaic_0001>

<llo_original>
// kernel: local_network_forward.1
$region0: #{local_network_forward.1}
  #allocation0 [shape = 'u32[]', space=smem, size = 0x4, offset = 0x4, fixed_abs, tag = 'smem constant byte address 0x4 - core index']
  #allocation1 [shape = 'u32[72,128]{1,0:T(1,128)}', space=vmem, size = 0x9000, scoped, tag = 'internal scratch']
  %s0 = inlined_call_operand.vmem [shape: f32[2,64,16], index: 0, kind: input, shape index: {}]
  %s1 = inlined_call_operand.vmem [shape: s32[2,1,256], index: 1, kind: input, shape index: {}]
  %s2 = inlined_call_operand.vmem [shape: s32[2,1,256], index: 2, kind: input, shape index: {}]
  %s3 = inlined_call_operand.vmem [shape: f32[2,1,256], index: 3, kind: input, shape index: {}]
  %s4 = inlined_call_operand.vmem [shape: f32[2,1,256], index: 4, kind: input, shape index: {}]
  %s5 = inlined_call_operand.vmem [shape: f32[2,4,256], index: 5, kind: output, shape index: {}]
  %s6 = sld [smem:[#allocation0]]
  $region53: #{local_network_forward.1} parent=0
    _
  %s8 = ssub.s32 1, %s6
  %s9 = scalar_select 0, %s8, %s6
  loop: start=0, step=1, limit=4
  $region2: #{local_network_forward.1} parent=0 // loop_pre_header
    _
  $region3: #{local_network_forward.1} parent=0 // loop_header
    %s11 = sphi 0, %s15
    %p12 = scmp.ge.s32.totalorder %s11, 4
    %s21 = sphi 0, %s23
    %s24 = sphi 0, %s21
    %s25 = sphi 0, %s24
    %s41 = sphi 0, %s25
    %s47 = sphi 0, %s49
    %s50 = sphi 0, %s47
    %s51 = sphi 0, %s50
    %s67 = sphi 0, %s51
    %s73 = sphi 0, %s75
    %s76 = sphi 0, %s73
    %s77 = sphi 0, %s76
    %s93 = sphi 0, %s77
    %s99 = sphi 0, %s101
    %s102 = sphi 0, %s99
    %s103 = sphi 0, %s102
    %s119 = sphi 0, %s103
    %s125 = sphi 0, %s127
    %s128 = sphi 0, %s125
    %s129 = sphi 0, %s128
    %s145 = sphi 0, %s129
    %s151 = sphi 0, %s153
    %s154 = sphi 0, %s151
    %s155 = sphi 0, %s154
    %s171 = sphi 0, %s155
  $region4: #{local_network_forward.1} parent=0 // loop_header_branch
    %14 = sbr.rel (%p12) target = $region8
  $region5: #{local_network_forward.1} parent=0 // loop_body
    %s16 = ssub.s32 %s11, 1
    %s17 = ssub.s32 %s11, 2
    %s18 = sadd.s32 %s11, 1
    %s19 = ssub.s32 %s11, %s18
    %p20 = scmp.eq.s32.totalorder %s19, 0
    %s22 = sadd.s32 %s21, 1
    %s23 = scalar_select %p20, %s21, %s22
    %p26 = pneg %p20
    %p27 = scmp.eq.s32.totalorder %s11, 1
    %p28 = por %p26, %p27
    %p29 = scmp.ne.s32.totalorder %s21, %s24
    %p30 = scmp.eq.s32.totalorder %s11, 0
    %p31 = por %p29, %p30
    %p32 = scmp.ne.s32.totalorder %s21, %s24
    %p33 = scmp.eq.s32.totalorder %s16, 1
    %p34 = por %p32, %p33
    %p35 = scmp.ne.s32.totalorder %s24, %s25
    %p36 = scmp.eq.s32.totalorder %s16, 0
    %p37 = por %p35, %p36
    %p38 = scmp.ne.s32.totalorder %s24, %s25
    %p39 = scmp.eq.s32.totalorder %s17, 1
    %p40 = por %p38, %p39
    %p42 = scmp.ne.s32.totalorder %s25, %s41
    %p43 = scmp.eq.s32.totalorder %s17, 0
    %p44 = por %p42, %p43
    %s45 = ssub.s32 %s11, %s18
    %p46 = scmp.eq.s32.totalorder %s45, 0
    %s48 = sadd.s32 %s47, 1
    %s49 = scalar_select %p46, %s47, %s48
    %p52 = pneg %p46
    %p53 = scmp.eq.s32.totalorder %s11, 1
    %p54 = por %p52, %p53
    %p55 = scmp.ne.s32.totalorder %s47, %s50
    %p56 = scmp.eq.s32.totalorder %s11, 0
    %p57 = por %p55, %p56
    %p58 = scmp.ne.s32.totalorder %s47, %s50
    %p59 = scmp.eq.s32.totalorder %s16, 1
    %p60 = por %p58, %p59
    %p61 = scmp.ne.s32.totalorder %s50, %s51
    %p62 = scmp.eq.s32.totalorder %s16, 0
    %p63 = por %p61, %p62
    %p64 = scmp.ne.s32.totalorder %s50, %s51
    %p65 = scmp.eq.s32.totalorder %s17, 1
    %p66 = por %p64, %p65
    %p68 = scmp.ne.s32.totalorder %s51, %s67
    %p69 = scmp.eq.s32.totalorder %s17, 0
    %p70 = por %p68, %p69
    %s71 = ssub.s32 %s11, %s18
    %p72 = scmp.eq.s32.totalorder %s71, 0
    %s74 = sadd.s32 %s73, 1
    %s75 = scalar_select %p72, %s73, %s74
    %p78 = pneg %p72
    %p79 = scmp.eq.s32.totalorder %s11, 1
    %p80 = por %p78, %p79
    %p81 = scmp.ne.s32.totalorder %s73, %s76
    %p82 = scmp.eq.s32.totalorder %s11, 0
    %p83 = por %p81, %p82
    %p84 = scmp.ne.s32.totalorder %s73, %s76
    %p85 = scmp.eq.s32.totalorder %s16, 1
    %p86 = por %p84, %p85
    %p87 = scmp.ne.s32.totalorder %s76, %s77
    %p88 = scmp.eq.s32.totalorder %s16, 0
    %p89 = por %p87, %p88
    %p90 = scmp.ne.s32.totalorder %s76, %s77
    %p91 = scmp.eq.s32.totalorder %s17, 1
    %p92 = por %p90, %p91
    %p94 = scmp.ne.s32.totalorder %s77, %s93
    %p95 = scmp.eq.s32.totalorder %s17, 0
    %p96 = por %p94, %p95
    %s97 = ssub.s32 %s11, %s18
    %p98 = scmp.eq.s32.totalorder %s97, 0
    %s100 = sadd.s32 %s99, 1
    %s101 = scalar_select %p98, %s99, %s100
    %p104 = pneg %p98
    %p105 = scmp.eq.s32.totalorder %s11, 1
    %p106 = por %p104, %p105
    %p107 = scmp.ne.s32.totalorder %s99, %s102
    %p108 = scmp.eq.s32.totalorder %s11, 0
    %p109 = por %p107, %p108
    %p110 = scmp.ne.s32.totalorder %s99, %s102
    %p111 = scmp.eq.s32.totalorder %s16, 1
    %p112 = por %p110, %p111
    %p113 = scmp.ne.s32.totalorder %s102, %s103
    %p114 = scmp.eq.s32.totalorder %s16, 0
    %p115 = por %p113, %p114
    %p116 = scmp.ne.s32.totalorder %s102, %s103
    %p117 = scmp.eq.s32.totalorder %s17, 1
    %p118 = por %p116, %p117
    %p120 = scmp.ne.s32.totalorder %s103, %s119
    %p121 = scmp.eq.s32.totalorder %s17, 0
    %p122 = por %p120, %p121
    %s123 = ssub.s32 %s11, %s18
    %p124 = scmp.eq.s32.totalorder %s123, 0
    %s126 = sadd.s32 %s125, 1
    %s127 = scalar_select %p124, %s125, %s126
    %p130 = pneg %p124
    %p131 = scmp.eq.s32.totalorder %s11, 1
    %p132 = por %p130, %p131
    %p133 = scmp.ne.s32.totalorder %s125, %s128
    %p134 = scmp.eq.s32.totalorder %s11, 0
    %p135 = por %p133, %p134
    %p136 = scmp.ne.s32.totalorder %s125, %s128
    %p137 = scmp.eq.s32.totalorder %s16, 1
    %p138 = por %p136, %p137
    %p139 = scmp.ne.s32.totalorder %s128, %s129
    %p140 = scmp.eq.s32.totalorder %s16, 0
    %p141 = por %p139, %p140
    %p142 = scmp.ne.s32.totalorder %s128, %s129
    %p143 = scmp.eq.s32.totalorder %s17, 1
    %p144 = por %p142, %p143
    %p146 = scmp.ne.s32.totalorder %s129, %s145
    %p147 = scmp.eq.s32.totalorder %s17, 0
    %p148 = por %p146, %p147
    %s149 = ssub.s32 %s11, %s18
    %p150 = scmp.eq.s32.totalorder %s149, 0
    %s152 = sadd.s32 %s151, 1
    %s153 = scalar_select %p150, %s151, %s152
    %p156 = pneg %p150
    %p157 = scmp.eq.s32.totalorder %s11, 1
    %p158 = por %p156, %p157
    %p159 = scmp.ne.s32.totalorder %s151, %s154
    %p160 = scmp.eq.s32.totalorder %s11, 0
    %p161 = por %p159, %p160
    %p162 = scmp.ne.s32.totalorder %s151, %s154
    %p163 = scmp.eq.s32.totalorder %s16, 1
    %p164 = por %p162, %p163
    %p165 = scmp.ne.s32.totalorder %s154, %s155
    %p166 = scmp.eq.s32.totalorder %s16, 0
    %p167 = por %p165, %p166
    %p168 = scmp.ne.s32.totalorder %s154, %s155
    %p169 = scmp.eq.s32.totalorder %s17, 1
    %p170 = por %p168, %p169
    %p172 = scmp.ne.s32.totalorder %s155, %s171
    %p173 = scmp.eq.s32.totalorder %s17, 0
    %p174 = por %p172, %p173
    %p175 = scmp.le.s32.totalorder 1, %s11
    %p176 = scmp.lt.s32.totalorder %s11, 3
    %p177 = pnand %p175, %p176
    %p178 = pneg %p177
    // Predicated region
    $region9: #{local_network_forward.1} parent=5 // pred_check
      _
    $region10: #{local_network_forward.1} parent=5 // pred_check_branch
      %180 = sbr.rel (%p177) target = $region12
    $region11: #{local_network_forward.1} parent=5 // pred_region
      %s181 = ssub.s32 %s11, 1
    $region12: #{local_network_forward.1} parent=5 // pred_fallthru
      _
    %p182 = scmp.lt.s32.totalorder %s11, 2
    // Predicated region
    $region13: #{local_network_forward.1} parent=5 // pred_check
      %p183 = pneg %p182
    $region14: #{local_network_forward.1} parent=5 // pred_check_branch
      %185 = sbr.rel (%p183) target = $region16
    $region15: #{local_network_forward.1} parent=5 // pred_region
      // Predicated region
      $region17: #{local_network_forward.1} parent=15 // pred_check
        %p186 = pneg %p31
      $region18: #{local_network_forward.1} parent=15 // pred_check_branch
        %188 = sbr.rel (%p186) target = $region20
      $region19: #{local_network_forward.1} parent=15 // pred_region
        %p189 = scmp.lt.s32.totalorder %s11, 1
        %s190 = scalar_select %p189, %s11, 1
        %s191 = smul.addr %s190, 8
        %s192 = smul.addr %s191, 8
        %s193 = scalar_lea.vmem %s0, %s192
      $region20: #{local_network_forward.1} parent=15 // pred_fallthru
        _
      // Predicated region
      $region21: #{local_network_forward.1} parent=15 // pred_check
        %p194 = pneg %p57
      $region22: #{local_network_forward.1} parent=15 // pred_check_branch
        %196 = sbr.rel (%p194) target = $region24
      $region23: #{local_network_forward.1} parent=15 // pred_region
        %p197 = scmp.lt.s32.totalorder %s11, 1
        %s198 = scalar_select %p197, %s11, 1
        %s199 = smul.addr %s198, 2
        %s200 = scalar_lea.vmem %s1, %s199
      $region24: #{local_network_forward.1} parent=15 // pred_fallthru
        _
      // Predicated region
      $region25: #{local_network_forward.1} parent=15 // pred_check
        %p201 = pneg %p83
      $region26: #{local_network_forward.1} parent=15 // pred_check_branch
        %203 = sbr.rel (%p201) target = $region28
      $region27: #{local_network_forward.1} parent=15 // pred_region
        %p204 = scmp.lt.s32.totalorder %s11, 1
        %s205 = scalar_select %p204, %s11, 1
        %s206 = smul.addr %s205, 2
        %s207 = scalar_lea.vmem %s2, %s206
      $region28: #{local_network_forward.1} parent=15 // pred_fallthru
        _
      // Predicated region
      $region29: #{local_network_forward.1} parent=15 // pred_check
        %p208 = pneg %p109
      $region30: #{local_network_forward.1} parent=15 // pred_check_branch
        %210 = sbr.rel (%p208) target = $region32
      $region31: #{local_network_forward.1} parent=15 // pred_region
        %p211 = scmp.lt.s32.totalorder %s11, 1
        %s212 = scalar_select %p211, %s11, 1
        %s213 = smul.addr %s212, 2
        %s214 = scalar_lea.vmem %s3, %s213
      $region32: #{local_network_forward.1} parent=15 // pred_fallthru
        _
      // Predicated region
      $region33: #{local_network_forward.1} parent=15 // pred_check
        %p215 = pneg %p135
      $region34: #{local_network_forward.1} parent=15 // pred_check_branch
        %217 = sbr.rel (%p215) target = $region36
      $region35: #{local_network_forward.1} parent=15 // pred_region
        %p218 = scmp.lt.s32.totalorder %s11, 1
        %s219 = scalar_select %p218, %s11, 1
        %s220 = smul.addr %s219, 2
        %s221 = scalar_lea.vmem %s4, %s220
      $region36: #{local_network_forward.1} parent=15 // pred_fallthru
        _
    $region16: #{local_network_forward.1} parent=5 // pred_fallthru
      _
    %p222 = scmp.le.s32.totalorder 1, %s11
    %p223 = scmp.lt.s32.totalorder %s11, 3
    %p224 = pnand %p222, %p223
    %p225 = pneg %p224
    // Predicated region
    $region37: #{local_network_forward.1} parent=5 // pred_check
      _
    $region38: #{local_network_forward.1} parent=5 // pred_check_branch
      %227 = sbr.rel (%p224) target = $region40
    $region39: #{local_network_forward.1} parent=5 // pred_region
      %s228 = ssub.s32 %s11, 1
      %p229 = scmp.lt.s32.totalorder %s16, 1
      %s230 = scalar_select %p229, %s16, 1
      %s231 = smul.addr %s230, 8
      %s232 = smul.addr %s231, 8
      %s233 = scalar_lea.vmem %s0, %s232
      %p234 = pneg %p37
      %p235 = pneg %p34
      %p236 = scmp.lt.s32.totalorder %s16, 1
      %s237 = scalar_select %p236, %s16, 1
      %s238 = smul.addr %s237, 2
      %s239 = scalar_lea.vmem %s1, %s238
      %p240 = pneg %p63
      %p241 = pneg %p60
      %p242 = scmp.lt.s32.totalorder %s16, 1
      %s243 = scalar_select %p242, %s16, 1
      %s244 = smul.addr %s243, 2
      %s245 = scalar_lea.vmem %s2, %s244
      %p246 = pneg %p89
      %p247 = pneg %p86
      %p248 = scmp.lt.s32.totalorder %s16, 1
      %s249 = scalar_select %p248, %s16, 1
      %s250 = smul.addr %s249, 2
      %s251 = scalar_lea.vmem %s3, %s250
      %p252 = pneg %p115
      %p253 = pneg %p112
      %p254 = scmp.lt.s32.totalorder %s16, 1
      %s255 = scalar_select %p254, %s16, 1
      %s256 = smul.addr %s255, 2
      %s257 = scalar_lea.vmem %s4, %s256
      %p258 = pneg %p141
      %p259 = pneg %p138
      %p260 = pneg %p167
      %p261 = pneg %p164
      %p262 = scmp.lt.s32.totalorder %s16, 1
      %s263 = scalar_select %p262, %s16, 1
      %s264 = smul.addr %s263, 2
      %s265 = smul.addr %s264, 4
      %s266 = scalar_lea.vmem %s5, %s265
      %p267 = scmp.lt.s32.totalorder %s16, 1
      %s268 = scalar_select %p267, %s16, 1
      %s269 = smul.addr %s268, 8
      %s270 = smul.addr %s269, 8
      %s271 = scalar_lea.vmem %s0, %s270
      %p272 = scmp.lt.s32.totalorder %s16, 1
      %s273 = scalar_select %p272, %s16, 1
      %s274 = smul.addr %s273, 2
      %s275 = scalar_lea.vmem %s1, %s274
      %p276 = scmp.lt.s32.totalorder %s16, 1
      %s277 = scalar_select %p276, %s16, 1
      %s278 = smul.addr %s277, 2
      %s279 = scalar_lea.vmem %s2, %s278
      %p280 = scmp.lt.s32.totalorder %s16, 1
      %s281 = scalar_select %p280, %s16, 1
      %s282 = smul.addr %s281, 2
      %s283 = scalar_lea.vmem %s3, %s282
      %p284 = scmp.lt.s32.totalorder %s16, 1
      %s285 = scalar_select %p284, %s16, 1
      %s286 = smul.addr %s285, 2
      %s287 = scalar_lea.vmem %s4, %s286
      %p288 = scmp.lt.s32.totalorder %s16, 1
      %s289 = scalar_select %p288, %s16, 1
      %s290 = smul.addr %s289, 2
      %s291 = smul.addr %s290, 4
      %s292 = scalar_lea.vmem %s5, %s291
      %v293 = vlaneseq
      %v294 = vshrl.u32 %v293, 7
      %v295 = vadd.s32 %v294, 8
      %v296 = vsub.s32 %v294, 1
      %v297 = vsub.s32 %v295, 1
      %v298 = vld [vmem:[%s275] sm:$0x3]
      %v299 = vld [vmem:[%s279] sm:$0x3]
      %v300 = vld [vmem:[%s283] sm:$0x3]
      %v301 = vld [vmem:[%s287] sm:$0x3]
      %v302 = vperm.slane %v298, 0
      %v303 = vperm.slane %v298, 1
      %vm304 = vcmp.eq.s32.totalorder %v294, %v302
      %vm305 = vcmp.eq.s32.totalorder %v294, %v303
      %vm306 = vcmp.eq.s32.totalorder %v295, %v302
      %vm307 = vcmp.eq.s32.totalorder %v295, %v303
      %v308 = vsub.f32 1.0, %v300
      %vm309 = vcmp.eq.s32.totalorder %v296, %v302
      %vm310 = vcmp.eq.s32.totalorder %v296, %v303
      %vm311 = vcmp.eq.s32.totalorder %v297, %v302
      %vm312 = vcmp.eq.s32.totalorder %v297, %v303
      %v314 = vperm.slane %v300, 0
      %v315 = vperm.slane %v300, 1
      %v318 = vsel %vm309, %v314, 0.0
      %v319 = vsel %vm310, %v315, 0.0
      %v320 = vsel %vm311, %v314, 0.0
      %v321 = vsel %vm312, %v315, 0.0
      %v323 = vperm.slane %v308, 0
      %v324 = vperm.slane %v308, 1
      %v327 = vsel %vm304, %v323, %v318
      %v328 = vsel %vm305, %v324, %v319
      %v329 = vsel %vm306, %v323, %v320
      %v330 = vsel %vm307, %v324, %v321
      %v331 = vperm.slane %v299, 0
      %v332 = vperm.slane %v299, 1
      %vm333 = vcmp.eq.s32.totalorder %v294, %v331
      %vm334 = vcmp.eq.s32.totalorder %v294, %v332
      %vm335 = vcmp.eq.s32.totalorder %v295, %v331
      %vm336 = vcmp.eq.s32.totalorder %v295, %v332
      %v337 = vsub.f32 1.0, %v301
      %vm338 = vcmp.eq.s32.totalorder %v296, %v331
      %vm339 = vcmp.eq.s32.totalorder %v296, %v332
      %vm340 = vcmp.eq.s32.totalorder %v297, %v331
      %vm341 = vcmp.eq.s32.totalorder %v297, %v332
      %v343 = vperm.slane %v301, 0
      %v344 = vperm.slane %v301, 1
      %v347 = vsel %vm338, %v343, 0.0
      %v348 = vsel %vm339, %v344, 0.0
      %v349 = vsel %vm340, %v343, 0.0
      %v350 = vsel %vm341, %v344, 0.0
      %v352 = vperm.slane %v337, 0
      %v353 = vperm.slane %v337, 1
      %v356 = vsel %vm333, %v352, %v347
      %v357 = vsel %vm334, %v353, %v348
      %v358 = vsel %vm335, %v352, %v349
      %v359 = vsel %vm336, %v353, %v350
      %v360 = vld [vmem:[%s271] sm:$0xff]
      %v361 = vld [vmem:[%s271 + $0x8] sm:$0xff]
      %v362 = vld [vmem:[%s271 + $0x10] sm:$0xff]
      %v363 = vld [vmem:[%s271 + $0x18] sm:$0xff]
      %v364 = vld [vmem:[%s271 + $0x20] sm:$0xff]
      %v365 = vld [vmem:[%s271 + $0x28] sm:$0xff]
      %v366 = vld [vmem:[%s271 + $0x30] sm:$0xff]
      %v367 = vld [vmem:[%s271 + $0x38] sm:$0xff]
      %vm368 = vcmask 130048
      %v370 = vsel %vm368, %v360, 0
      %v373 = vsel %vm368, %v361, 0
      %v376 = vsel %vm368, %v362, 0
      %v379 = vsel %vm368, %v363, 0
      %v382 = vsel %vm368, %v364, 0
      %v385 = vsel %vm368, %v365, 0
      %v388 = vsel %vm368, %v366, 0
      %v391 = vsel %vm368, %v367, 0
      %393 = vmatpush.msra.mxu0 0.0
      %394 = vmatpush.msra.mxu0 0.0
      %395 = vmatpush.msra.mxu0 0.0
      %396 = vmatpush.msra.mxu0 0.0
      %397 = vmatpush.msra.mxu0 0.0
      %398 = vmatpush.msra.mxu0 0.0
      %399 = vmatpush.msra.mxu0 0.0
      %400 = vmatpush.msra.mxu0 0.0
      %401 = vmatpush.msra.mxu0 0.0
      %402 = vmatpush.msra.mxu0 0.0
      %403 = vmatpush.msra.mxu0 0.0
      %404 = vmatpush.msra.mxu0 0.0
      %405 = vmatpush.msra.mxu0 0.0
      %406 = vmatpush.msra.mxu0 0.0
      %407 = vmatpush.msra.mxu0 %v329
      %408 = vmatpush.msra.mxu0 %v327
      %409 = vmatmul.f32.gmra.mxu0 %v370
      %v410 = vpop.f32.mrf.mxu0
      %v411 = vadd.f32 0.0, %v410
      %412 = vmatmul.f32.gmra.mxu0 %v373
      %v413 = vpop.f32.mrf.mxu0
      %v414 = vadd.f32 0.0, %v413
      %415 = vmatmul.f32.gmra.mxu0 %v376
      %v416 = vpop.f32.mrf.mxu0
      %v417 = vadd.f32 0.0, %v416
      %418 = vmatmul.f32.gmra.mxu0 %v379
      %v419 = vpop.f32.mrf.mxu0
      %v420 = vadd.f32 0.0, %v419
      %421 = vmatmul.f32.gmra.mxu0 %v382
      %v422 = vpop.f32.mrf.mxu0
      %v423 = vadd.f32 0.0, %v422
      %424 = vmatmul.f32.gmra.mxu0 %v385
      %v425 = vpop.f32.mrf.mxu0
      %v426 = vadd.f32 0.0, %v425
      %427 = vmatmul.f32.gmra.mxu0 %v388
      %v428 = vpop.f32.mrf.mxu0
      %v429 = vadd.f32 0.0, %v428
      %430 = vmatmul.f32.gmra.mxu0 %v391
      %v431 = vpop.f32.mrf.mxu0
      %v432 = vadd.f32 0.0, %v431
      %433 = vdwg.mxu0
      %434 = vmatpush.msra.mxu0 0.0
      %435 = vmatpush.msra.mxu0 0.0
      %436 = vmatpush.msra.mxu0 0.0
      %437 = vmatpush.msra.mxu0 0.0
      %438 = vmatpush.msra.mxu0 0.0
      %439 = vmatpush.msra.mxu0 0.0
      %440 = vmatpush.msra.mxu0 0.0
      %441 = vmatpush.msra.mxu0 0.0
      %442 = vmatpush.msra.mxu0 0.0
      %443 = vmatpush.msra.mxu0 0.0
      %444 = vmatpush.msra.mxu0 0.0
      %445 = vmatpush.msra.mxu0 0.0
      %446 = vmatpush.msra.mxu0 0.0
      %447 = vmatpush.msra.mxu0 0.0
      %448 = vmatpush.msra.mxu0 %v330
      %449 = vmatpush.msra.mxu0 %v328
      %450 = vmatmul.f32.gmra.mxu0 %v370
      %v451 = vpop.f32.mrf.mxu0
      %v452 = vadd.f32 0.0, %v451
      %453 = vmatmul.f32.gmra.mxu0 %v373
      %v454 = vpop.f32.mrf.mxu0
      %v455 = vadd.f32 0.0, %v454
      %456 = vmatmul.f32.gmra.mxu0 %v376
      %v457 = vpop.f32.mrf.mxu0
      %v458 = vadd.f32 0.0, %v457
      %459 = vmatmul.f32.gmra.mxu0 %v379
      %v460 = vpop.f32.mrf.mxu0
      %v461 = vadd.f32 0.0, %v460
      %462 = vmatmul.f32.gmra.mxu0 %v382
      %v463 = vpop.f32.mrf.mxu0
      %v464 = vadd.f32 0.0, %v463
      %465 = vmatmul.f32.gmra.mxu0 %v385
      %v466 = vpop.f32.mrf.mxu0
      %v467 = vadd.f32 0.0, %v466
      %468 = vmatmul.f32.gmra.mxu0 %v388
      %v469 = vpop.f32.mrf.mxu0
      %v470 = vadd.f32 0.0, %v469
      %471 = vmatmul.f32.gmra.mxu0 %v391
      %v472 = vpop.f32.mrf.mxu0
      %v473 = vadd.f32 0.0, %v472
      %474 = vdwg.mxu0
      %v475 = vmul.f32 %v411, %v356
      %v476 = vmul.f32 %v452, %v357
      %v477 = vmul.f32 %v414, %v358
      %v478 = vmul.f32 %v455, %v359
      %v479 = vadd.f32 %v475, %v477
      %v480 = vrot.slane %v479, 4
      %v481 = vadd.f32 %v479, %v480
      %v482 = vrot.slane %v481, 2
      %v483 = vadd.f32 %v481, %v482
      %v484 = vrot.slane %v483, 1
      %v485 = vadd.f32 %v483, %v484
      %v486 = vadd.f32 %v476, %v478
      %v487 = vrot.slane %v486, 4
      %v488 = vadd.f32 %v486, %v487
      %v489 = vrot.slane %v488, 2
      %v490 = vadd.f32 %v488, %v489
      %v491 = vrot.slane %v490, 1
      %v492 = vadd.f32 %v490, %v491
      %v493 = vmul.f32 %v417, %v356
      %v494 = vmul.f32 %v458, %v357
      %v495 = vmul.f32 %v420, %v358
      %v496 = vmul.f32 %v461, %v359
      %v497 = vadd.f32 %v493, %v495
      %v498 = vrot.slane %v497, 4
      %v499 = vadd.f32 %v497, %v498
      %v500 = vrot.slane %v499, 2
      %v501 = vadd.f32 %v499, %v500
      %v502 = vrot.slane %v501, 1
      %v503 = vadd.f32 %v501, %v502
      %v504 = vadd.f32 %v494, %v496
      %v505 = vrot.slane %v504, 4
      %v506 = vadd.f32 %v504, %v505
      %v507 = vrot.slane %v506, 2
      %v508 = vadd.f32 %v506, %v507
      %v509 = vrot.slane %v508, 1
      %v510 = vadd.f32 %v508, %v509
      %v511 = vmul.f32 %v423, %v356
      %v512 = vmul.f32 %v464, %v357
      %v513 = vmul.f32 %v426, %v358
      %v514 = vmul.f32 %v467, %v359
      %v515 = vadd.f32 %v511, %v513
      %v516 = vrot.slane %v515, 4
      %v517 = vadd.f32 %v515, %v516
      %v518 = vrot.slane %v517, 2
      %v519 = vadd.f32 %v517, %v518
      %v520 = vrot.slane %v519, 1
      %v521 = vadd.f32 %v519, %v520
      %v522 = vadd.f32 %v512, %v514
      %v523 = vrot.slane %v522, 4
      %v524 = vadd.f32 %v522, %v523
      %v525 = vrot.slane %v524, 2
      %v526 = vadd.f32 %v524, %v525
      %v527 = vrot.slane %v526, 1
      %v528 = vadd.f32 %v526, %v527
      %v529 = vmul.f32 %v429, %v356
      %v530 = vmul.f32 %v470, %v357
      %v531 = vmul.f32 %v432, %v358
      %v532 = vmul.f32 %v473, %v359
      %v533 = vadd.f32 %v529, %v531
      %v534 = vrot.slane %v533, 4
      %v535 = vadd.f32 %v533, %v534
      %v536 = vrot.slane %v535, 2
      %v537 = vadd.f32 %v535, %v536
      %v538 = vrot.slane %v537, 1
      %v539 = vadd.f32 %v537, %v538
      %v540 = vadd.f32 %v530, %v532
      %v541 = vrot.slane %v540, 4
      %v542 = vadd.f32 %v540, %v541
      %v543 = vrot.slane %v542, 2
      %v544 = vadd.f32 %v542, %v543
      %v545 = vrot.slane %v544, 1
      %v546 = vadd.f32 %v544, %v545
      %vm547 = vcmask 1040384
      %v548 = vsel %vm547, %v485, %v503
      %v549 = vsel %vm547, %v492, %v510
      %vm550 = vcmask 1041408
      %v551 = vsel %vm550, %v548, %v521
      %v552 = vsel %vm550, %v549, %v528
      %vm553 = vcmask 1042432
      %v554 = vsel %vm553, %v551, %v539
      %v555 = vsel %vm553, %v552, %v546
      %v558 = vrot.slane %v555, 4
      %vm559 = vcmask 1043456
      %v560 = vsel %vm559, %v554, %v558
      %562 = vst [vmem:[%s292] sm:$0xff] %v560
      %p563 = scmp.lt.s32.totalorder %s16, 1
      %s564 = scalar_select %p563, %s16, 1
      %s565 = smul.addr %s564, 2
      %s566 = smul.addr %s565, 4
      %s567 = scalar_lea.vmem %s5, %s566
      // Predicated region
      $region41: #{local_network_forward.1} parent=39 // pred_check
        %p568 = pneg %p164
      $region42: #{local_network_forward.1} parent=39 // pred_check_branch
        %570 = sbr.rel (%p568) target = $region44
      $region43: #{local_network_forward.1} parent=39 // pred_region
        _
      $region44: #{local_network_forward.1} parent=39 // pred_fallthru
        _
    $region40: #{local_network_forward.1} parent=5 // pred_fallthru
      _
    %p571 = scmp.le.s32.totalorder 2, %s11
    // Predicated region
    $region45: #{local_network_forward.1} parent=5 // pred_check
      %p572 = pneg %p571
    $region46: #{local_network_forward.1} parent=5 // pred_check_branch
      %574 = sbr.rel (%p572) target = $region48
    $region47: #{local_network_forward.1} parent=5 // pred_region
      %s575 = ssub.s32 %s11, 2
      // Predicated region
      $region49: #{local_network_forward.1} parent=47 // pred_check
        %p576 = pneg %p170
      $region50: #{local_network_forward.1} parent=47 // pred_check_branch
        %578 = sbr.rel (%p576) target = $region52
      $region51: #{local_network_forward.1} parent=47 // pred_region
        %p579 = scmp.lt.s32.totalorder %s17, 1
        %s580 = scalar_select %p579, %s17, 1
        %s581 = smul.addr %s580, 2
        %s582 = smul.addr %s581, 4
        %s583 = scalar_lea.vmem %s5, %s582
      $region52: #{local_network_forward.1} parent=47 // pred_fallthru
        _
    $region48: #{local_network_forward.1} parent=5 // pred_fallthru
      _
  $region6: #{local_network_forward.1} parent=0 // loop_footer
    %s15 = sadd.s32 1, %s11
  $region7: #{local_network_forward.1} parent=0 // loop_footer_branch
    %10 = sbr.rel target = $region3
  $region8: #{local_network_forward.1} parent=0 // loop_exit
    _

</llo_original>
